<compile_context>
chip_gen: v6e
topology: v6e:2x2x1
jax: 0.10.0
libtpu: 0.0.40
codegen_flags: <defaults>
</compile_context>

<pallas_src>
import functools

import jax
import jax.numpy as jnp
from jax.experimental import pallas as pl
from jax.experimental.pallas import tpu as pltpu


# ---------------------------------------------------------------------------
# Exact MsgLayer.forward semantics: pass-through, no kernel, no copy.
# ---------------------------------------------------------------------------
def msg_layer_forward(m_src, root_src):
    """{'m': edges.src['m'], 'root': edges.src['root']} — identity, zero cost."""
    return {"m": m_src, "root": root_src}


def _round_up(x, m):
    return (x + m - 1) // m * m


# ---------------------------------------------------------------------------
# Gated-message Pallas kernel (the parameterized, commented-out path).
# Per grid step over the edge axis the kernel sees:
#   x_ref : (TE, K)   m_ref : (TE, H)
#   wr_ref: (K, H)    ur_ref: (H, H)   bu_ref: (1, H)   rm_ref: (TE, H)
# ---------------------------------------------------------------------------
def _gated_msg_kernel(x_ref, m_ref, wr_ref, ur_ref, bu_ref, rm_ref):
    # All math in f32 (v5e has no bf16 VPU); cast only at the final store.
    x = x_ref[...].astype(jnp.float32)
    m = m_ref[...].astype(jnp.float32)
    r = jnp.dot(x, wr_ref[...], preferred_element_type=jnp.float32)
    r = r + jnp.dot(m, ur_ref[...], preferred_element_type=jnp.float32)
    r = jax.nn.sigmoid(r + bu_ref[...])          # exp -> EUP slot (free-ish)
    rm_ref[...] = (r * m).astype(rm_ref.dtype)


def _gated_message_ref(x_dst, m_src, wr_t, ur_t, bu):
    """Plain-jnp fast path / reference (small E, or correctness checks)."""
    x = x_dst.astype(jnp.float32)
    m = m_src.astype(jnp.float32)
    r = jax.nn.sigmoid(x @ wr_t.astype(jnp.float32)
                       + m @ ur_t.astype(jnp.float32)
                       + bu.astype(jnp.float32))
    return (r * m).astype(m_src.dtype)


@functools.partial(jax.jit, static_argnames=("edge_tile", "min_pallas_edges"))
def gated_message(x_dst, m_src, wr_t, ur_t, bu, *, edge_tile=2048,
                  min_pallas_edges=4096):
    """rm = sigmoid(x_dst @ wr_t + m_src @ ur_t + bu) * m_src.

    x_dst: (E, K), m_src: (E, H), wr_t: (K, H), ur_t: (H, H), bu: (1, H).
    x/m/rm are streamed in the caller's dtype (bf16 halves HBM traffic);
    math is done in f32 inside the kernel.
    """
    E, K = x_dst.shape
    _, H = m_src.shape

    # Small-E fast path: kernel launch + pipeline prologue exceeds the work;
    # let XLA fuse a plain expression instead.
    if E < min_pallas_edges:
        return _gated_message_ref(x_dst, m_src, wr_t, ur_t, bu)

    wr_t = wr_t.astype(jnp.float32)
    ur_t = ur_t.astype(jnp.float32)
    bu = bu.astype(jnp.float32)

    # Edge tile: multiple of 16 (bf16 sublane packing), capped at edge_tile,
    # and capped so the grid has >= 2 steps (keeps both TCs busy on v7x).
    TE = min(edge_tile, max(16, _round_up(pl.cdiv(E, 2), 16)))
    n_steps = pl.cdiv(E, TE)
    grid = (n_steps,)

    # 3-deep buffering on the streamed inputs when the grid is long enough;
    # fall back cleanly if this jax version's BlockSpec lacks pipeline_mode.
    def stream_spec(block_shape):
        if n_steps >= 3:
            try:
                return pl.BlockSpec(block_shape, lambda i: (i, 0),
                                    pipeline_mode=pl.Buffered(3))
            except (TypeError, AttributeError):
                pass
        return pl.BlockSpec(block_shape, lambda i: (i, 0))

    itemsize = jnp.dtype(m_src.dtype).itemsize
    cost = pl.CostEstimate(
        flops=2 * E * K * H + 2 * E * H * H + 3 * E * H,
        transcendentals=E * H,
        bytes_accessed=(E * K + 2 * E * H) * itemsize
        + (K * H + H * H + H) * 4,
    )

    return pl.pallas_call(
        _gated_msg_kernel,
        out_shape=jax.ShapeDtypeStruct((E, H), m_src.dtype),
        grid=grid,
        in_specs=[
            # Per-edge tensors stream over the grid; last dims == full array
            # dims (no 128-lane padding), tail block masked by Pallas.
            stream_spec((TE, K)),
            stream_spec((TE, H)),
            # Weights/bias: constant block index -> DMA'd once, VMEM-resident.
            pl.BlockSpec((K, H), lambda i: (0, 0)),
            pl.BlockSpec((H, H), lambda i: (0, 0)),
            pl.BlockSpec((1, H), lambda i: (0, 0)),
        ],
        out_specs=pl.BlockSpec((TE, H), lambda i: (i, 0)),
        compiler_params=pltpu.CompilerParams(
            # Independent edge tiles -> shard across the 2 TCs on v7x.
            dimension_semantics=("parallel",),
            # Under v7x's 64 MiB/TC; footprint here is << this on every gen.
            vmem_limit_bytes=48 * 1024 * 1024,
        ),
        cost_estimate=cost,
    )(x_dst, m_src, wr_t, ur_t, bu)


def msg_layer_forward_full(x_dst, m_src, root_src, wr_t, ur_t, bu, **kw):
    """The documented (commented-out) forward: {'m', 'rm', 'root'}.
    m/root are pass-through by reference (no copy); rm from one Pallas kernel
    that reads m_src from HBM exactly once."""
    rm = gated_message(x_dst, m_src, wr_t, ur_t, bu, **kw)
    return {"m": m_src, "rm": rm, "root": root_src}


# ---------------------------------------------------------------------------
# Deterministic parameter init (shapes from MsgLayer.__init__).
# torch.nn.Linear stores weight as [out, in]; we hand the kernel W^T so it
# computes x @ W^T directly.
# ---------------------------------------------------------------------------
def init_params(in_feats, hidden_size):
    k = jax.random.PRNGKey(42)
    k1, k2, k3 = jax.random.split(k, 3)
    wr = jax.random.normal(k1, (hidden_size, in_feats), jnp.float32) * 0.1
    ur = jax.random.normal(k2, (hidden_size, hidden_size), jnp.float32) * 0.1
    bu = jax.random.normal(k3, (1, hidden_size), jnp.float32) * 0.1
    return wr.T, ur.T, bu


if __name__ == "__main__":
    in_feats, hidden = 8, 32
    wr_t, ur_t, bu = init_params(in_feats, hidden)

    key = jax.random.PRNGKey(0)

    # 1) Exact forward pass (what the PyTorch module actually returns):
    #    pure pass-through, no kernel, no HBM traffic.
    E0 = 16
    kx, km, kr = jax.random.split(key, 3)
    x0 = jax.random.normal(kx, (E0, in_feats), jnp.float32)    # edges.dst['x']
    m0 = jax.random.normal(km, (E0, hidden), jnp.float32)      # edges.src['m']
    root0 = jax.random.normal(kr, (E0, 4), jnp.float32)        # edges.src['root']
    out = msg_layer_forward(m0, root0)
    jax.block_until_ready((out["m"], out["root"]))
    assert out["m"] is m0 and out["root"] is root0

    # 2) Gated-message Pallas kernel, f32 streams, small E forced through the
    #    kernel (min_pallas_edges=0) to exercise it.
    full = msg_layer_forward_full(x0, m0, root0, wr_t, ur_t, bu,
                                  min_pallas_edges=0)
    rm = jax.block_until_ready(full["rm"])
    rm_ref = _gated_message_ref(x0, m0, wr_t, ur_t, bu)
    assert jnp.allclose(rm, rm_ref, atol=1e-5, rtol=1e-5)
    assert full["m"] is m0 and full["root"] is root0

    # 3) bf16 streams + non-divisible edge count (E=1000 -> TE=512, grid=(2,),
    #    masked tail block) — the traffic-optimized configuration.
    E1 = 1000
    k1x, k1m = jax.random.split(jax.random.PRNGKey(1), 2)
    x1 = jax.random.normal(k1x, (E1, in_feats), jnp.float32).astype(jnp.bfloat16)
    m1 = jax.random.normal(k1m, (E1, hidden), jnp.float32).astype(jnp.bfloat16)
    rm1 = jax.block_until_ready(
        gated_message(x1, m1, wr_t, ur_t, bu, min_pallas_edges=0))
    rm1_ref = _gated_message_ref(x1, m1, wr_t, ur_t, bu)
    assert rm1.dtype == jnp.bfloat16
    assert jnp.allclose(rm1.astype(jnp.float32), rm1_ref.astype(jnp.float32),
                        atol=2e-2, rtol=2e-2)

    # 4) Default small-E fast path (skips Pallas below min_pallas_edges).
    rm_fast = jax.block_until_ready(gated_message(x0, m0, wr_t, ur_t, bu))
    assert jnp.allclose(rm_fast, rm_ref, atol=1e-5, rtol=1e-5)

    print("KERNEL_OK")
</pallas_src>

<mosaic_0001>
module attributes {stable_mosaic.version = 11 : i64} {
  func.func @_gated_msg_kernel(%arg0: i32, %arg1: memref<16x8xf32, #tpu.memory_space<vmem>>, %arg2: memref<16x32xf32, #tpu.memory_space<vmem>>, %arg3: memref<8x32xf32, #tpu.memory_space<vmem>>, %arg4: memref<32x32xf32, #tpu.memory_space<vmem>>, %arg5: memref<1x32xf32, #tpu.memory_space<vmem>>, %arg6: memref<16x32xf32, #tpu.memory_space<vmem>>) attributes {dimension_semantics = [#tpu.dimension_semantics<parallel>], iteration_bounds = array<i64: 1>, scalar_prefetch = 0 : i64, scratch_operands = 0 : i64, tpu.core_type = #tpu.core_type<tc>, window_params = [{transform_indices = @transform_0, window_bounds = array<i64: 16, 8>}, {transform_indices = @transform_1, window_bounds = array<i64: 16, 32>}, {pipeline_mode = #tpu.pipeline_mode<synchronous>, transform_indices = @transform_2, window_bounds = array<i64: 8, 32>}, {pipeline_mode = #tpu.pipeline_mode<synchronous>, transform_indices = @transform_3, window_bounds = array<i64: 32, 32>}, {pipeline_mode = #tpu.pipeline_mode<synchronous>, transform_indices = @transform_4, window_bounds = array<i64: 1, 32>}, {transform_indices = @transform_5, window_bounds = array<i64: 16, 32>}]} {
    %c0 = arith.constant 0 : index
    %c0_0 = arith.constant 0 : index
    %0 = vector.load %arg1[%c0, %c0_0] : memref<16x8xf32, #tpu.memory_space<vmem>>, vector<16x8xf32>
    %c0_1 = arith.constant 0 : index
    %c0_2 = arith.constant 0 : index
    %1 = vector.load %arg2[%c0_1, %c0_2] : memref<16x32xf32, #tpu.memory_space<vmem>>, vector<16x32xf32>
    %c0_3 = arith.constant 0 : index
    %c0_4 = arith.constant 0 : index
    %2 = vector.load %arg3[%c0_3, %c0_4] : memref<8x32xf32, #tpu.memory_space<vmem>>, vector<8x32xf32>
    %cst = arith.constant dense<0.000000e+00> : vector<16x32xf32>
    %3 = tpu.matmul %0, %2, %cst {dimension_numbers = #tpu.dot_dimension_numbers<[1], [0], [0], [1], [0, 0, 1, 1], [], []>} : vector<16x8xf32>, vector<8x32xf32>, vector<16x32xf32> -> vector<16x32xf32>
    %c0_5 = arith.constant 0 : index
    %c0_6 = arith.constant 0 : index
    %4 = vector.load %arg4[%c0_5, %c0_6] : memref<32x32xf32, #tpu.memory_space<vmem>>, vector<32x32xf32>
    %cst_7 = arith.constant dense<0.000000e+00> : vector<16x32xf32>
    %5 = tpu.matmul %1, %4, %cst_7 {dimension_numbers = #tpu.dot_dimension_numbers<[1], [0], [0], [1], [0, 0, 1, 1], [], []>} : vector<16x32xf32>, vector<32x32xf32>, vector<16x32xf32> -> vector<16x32xf32>
    %6 = arith.addf %3, %5 : vector<16x32xf32>
    %c0_8 = arith.constant 0 : index
    %c0_9 = arith.constant 0 : index
    %7 = vector.load %arg5[%c0_8, %c0_9] : memref<1x32xf32, #tpu.memory_space<vmem>>, vector<1x32xf32>
    %8 = vector.broadcast %7 : vector<1x32xf32> to vector<16x32xf32>
    %9 = arith.addf %6, %8 : vector<16x32xf32>
    %10 = arith.negf %9 : vector<16x32xf32>
    %11 = math.exp %10 : vector<16x32xf32>
    %cst_10 = arith.constant 1.000000e+00 : f32
    %12 = vector.broadcast %cst_10 : f32 to vector<16x32xf32>
    %13 = arith.addf %12, %11 : vector<16x32xf32>
    %14 = arith.divf %12, %13 : vector<16x32xf32>
    %15 = arith.mulf %14, %1 : vector<16x32xf32>
    %c0_11 = arith.constant 0 : index
    %c0_12 = arith.constant 0 : index
    %16 = vector.load %arg6[%c0_11, %c0_12] : memref<16x32xf32, #tpu.memory_space<vmem>>, vector<16x32xf32>
    tpu.vector_store %arg6[%c0_11, %c0_12], %15 {strides = array<i32>} : memref<16x32xf32, #tpu.memory_space<vmem>>, vector<16x32xf32>,
    return
  }
  func.func @transform_0(%arg0: i32) -> (i32, i32) {
    %c0_i32 = arith.constant 0 : i32
    %c0_i32_0 = arith.constant 0 : i32
    return %arg0, %c0_i32 : i32, i32
  }
  func.func @transform_1(%arg0: i32) -> (i32, i32) {
    %c0_i32 = arith.constant 0 : i32
    %c0_i32_0 = arith.constant 0 : i32
    return %arg0, %c0_i32 : i32, i32
  }
  func.func @transform_2(%arg0: i32) -> (i32, i32) {
    %c0_i32 = arith.constant 0 : i32
    %c0_i32_0 = arith.constant 0 : i32
    %c0_i32_1 = arith.constant 0 : i32
    return %c0_i32, %c0_i32_0 : i32, i32
  }
  func.func @transform_3(%arg0: i32) -> (i32, i32) {
    %c0_i32 = arith.constant 0 : i32
    %c0_i32_0 = arith.constant 0 : i32
    %c0_i32_1 = arith.constant 0 : i32
    return %c0_i32, %c0_i32_0 : i32, i32
  }
  func.func @transform_4(%arg0: i32) -> (i32, i32) {
    %c0_i32 = arith.constant 0 : i32
    %c0_i32_0 = arith.constant 0 : i32
    %c0_i32_1 = arith.constant 0 : i32
    return %c0_i32, %c0_i32_0 : i32, i32
  }
  func.func @transform_5(%arg0: i32) -> (i32, i32) {
    %c0_i32 = arith.constant 0 : i32
    %c0_i32_0 = arith.constant 0 : i32
    return %arg0, %c0_i32 : i32, i32
  }
}

</mosaic_0001>

<llo_original>
// kernel: gated_message.1
$region0: #{gated_message.1}
  #allocation0 [shape = 'u32[]', space=smem, size = 0x4, offset = 0x4, fixed_abs, tag = 'smem constant byte address 0x4 - core index']
  #allocation1 [shape = 'u32[144,128]{1,0:T(1,128)}', space=vmem, size = 0x12000, scoped, tag = 'internal scratch']
  %s0 = inlined_call_operand.vmem [shape: f32[16,8], index: 0, kind: input, shape index: {}]
  %s1 = inlined_call_operand.vmem [shape: f32[16,32], index: 1, kind: input, shape index: {}]
  %s2 = inlined_call_operand.vmem [shape: f32[8,32], index: 2, kind: input, shape index: {}]
  %s3 = inlined_call_operand.hbm [shape: f32[32,32], index: 3, kind: input, shape index: {}]
  %s4 = inlined_call_operand.vmem [shape: f32[1,32], index: 4, kind: input, shape index: {}]
  %s5 = inlined_call_operand.hbm [shape: f32[16,32], index: 5, kind: output, shape index: {}]
  %s6 = sld [smem:[#allocation0]]
  $region34: #{gated_message.1} parent=0
    _
  %s8 = ssub.s32 1, %s6
  %s9 = scalar_select 0, %s8, %s6
  $region1: #{gated_message.1} parent=0
    #allocation2 [shape = 'u8[16384]{0}', space=vmem, size = 0x4000, scoped, tag = 'input window, operand 3, single buffered']
    #allocation3 [shape = 's32[1]{0}', space=sflag, size = 0x4, scoped, tag = 'scoped memory for gated_message.1']
    #allocation4 [shape = 's32[1]{0}', space=sflag, size = 0x4, scoped, tag = 'scoped memory for gated_message.1']
    #allocation5 [shape = 'u8[8192]{0}', space=vmem, size = 0x2000, scoped, tag = 'output window, operand 0, single buffered']
    %10 = vsyncpa [#allocation3], 0
    %11 = vsyncpa [#allocation4], 0
    // Predicated region
    $region2: #{gated_message.1} parent=1 // pred_check
      _
    $region3: #{gated_message.1} parent=1 // pred_check_branch
      %13 = sbr.rel (0) target = $region5
    $region4: #{gated_message.1} parent=1 // pred_region
      _
    $region5: #{gated_message.1} parent=1 // pred_fallthru
      _
    // Predicated region
    $region6: #{gated_message.1} parent=1 // pred_check
      _
    $region7: #{gated_message.1} parent=1 // pred_check_branch
      %15 = sbr.rel (0) target = $region9
    $region8: #{gated_message.1} parent=1 // pred_region
      _
    $region9: #{gated_message.1} parent=1 // pred_fallthru
      _
    // Predicated region
    $region10: #{gated_message.1} parent=1 // pred_check
      _
    $region11: #{gated_message.1} parent=1 // pred_check_branch
      %17 = sbr.rel (0) target = $region13
    $region12: #{gated_message.1} parent=1 // pred_region
      _
    $region13: #{gated_message.1} parent=1 // pred_fallthru
      _
    // Predicated region
    $region14: #{gated_message.1} parent=1 // pred_check
      _
    $region15: #{gated_message.1} parent=1 // pred_check_branch
      %19 = sbr.rel (0) target = $region17
    $region16: #{gated_message.1} parent=1 // pred_region
      %s21 = ssub.s32 512, 512
      %22 = vsyncadd [#allocation3], %s21
      %s23 = sshll.u32 [#allocation2], 4
      %s24 = int_to_ptr.vmem [resolvable:$true] %s23
      %29 = dma.hbm_to_vmem [thread:$0]  %s3, 512, %s24, [#allocation3], 128, 128, 8
    $region17: #{gated_message.1} parent=1 // pred_fallthru
      _
    // Predicated region
    $region18: #{gated_message.1} parent=1 // pred_check
      _
    $region19: #{gated_message.1} parent=1 // pred_check_branch
      %31 = sbr.rel (0) target = $region21
    $region20: #{gated_message.1} parent=1 // pred_region
      _
    $region21: #{gated_message.1} parent=1 // pred_fallthru
      _
    // Predicated region
    $region22: #{gated_message.1} parent=1 // pred_check
      _
    $region23: #{gated_message.1} parent=1 // pred_check_branch
      %33 = sbr.rel (0) target = $region25
    $region24: #{gated_message.1} parent=1 // pred_region
      %34 = dma.done [#allocation3], 512
    $region25: #{gated_message.1} parent=1 // pred_fallthru
      _
    %v35 = vld [vmem:[%s0] sm:$0xff]
    %v36 = vld [vmem:[%s0 + $0x8] sm:$0xff]
    %v37 = vld [vmem:[%s1] sm:$0xff]
    %v38 = vld [vmem:[%s1 + $0x8] sm:$0xff]
    %v39 = vld [vmem:[%s2] sm:$0xff]
    %v40 = vld [vmem:[#allocation2] sm:$0xff]
    %v41 = vld [vmem:[#allocation2 + $0x8] sm:$0xff]
    %v42 = vld [vmem:[#allocation2 + $0x10] sm:$0xff]
    %v43 = vld [vmem:[#allocation2 + $0x18] sm:$0xff]
    %vm44 = vcmask 261120
    %v46 = vsel %vm44, %v37, 0
    %v49 = vsel %vm44, %v38, 0
    %51 = vmatprep.subr.mxu0 0.0
    %52 = vmatpush1.msra.mxu0 0.0
    %53 = vmatprep.subr.mxu0 0.0
    %54 = vmatpush1.msra.mxu0 0.0
    %55 = vmatprep.subr.mxu0 0.0
    %56 = vmatpush1.msra.mxu0 0.0
    %57 = vmatprep.subr.mxu0 0.0
    %58 = vmatpush1.msra.mxu0 0.0
    %59 = vmatprep.subr.mxu0 0.0
    %60 = vmatpush1.msra.mxu0 0.0
    %61 = vmatprep.subr.mxu0 0.0
    %62 = vmatpush1.msra.mxu0 0.0
    %63 = vmatprep.subr.mxu0 0.0
    %64 = vmatpush1.msra.mxu0 0.0
    %65 = vmatprep.subr.mxu0 0.0
    %66 = vmatpush1.msra.mxu0 0.0
    %67 = vmatprep.subr.mxu0 0.0
    %68 = vmatpush1.msra.mxu0 0.0
    %69 = vmatprep.subr.mxu0 0.0
    %70 = vmatpush1.msra.mxu0 0.0
    %71 = vmatprep.subr.mxu0 0.0
    %72 = vmatpush1.msra.mxu0 0.0
    %73 = vmatprep.subr.mxu0 0.0
    %74 = vmatpush1.msra.mxu0 0.0
    %75 = vmatprep.subr.mxu0 0.0
    %76 = vmatpush1.msra.mxu0 %v43
    %77 = vmatprep.subr.mxu0 0.0
    %78 = vmatpush1.msra.mxu0 %v42
    %79 = vmatprep.subr.mxu0 0.0
    %80 = vmatpush1.msra.mxu0 %v41
    %81 = vmatprep.subr.mxu0 0.0
    %82 = vmatpush1.msra.mxu0 %v40
    %83 = vmatprep.subr.mxu0 0.0
    %84 = vmatpush2.msra.mxu0 0.0
    %85 = vmatprep.subr.mxu0 0.0
    %86 = vmatpush2.msra.mxu0 0.0
    %87 = vmatprep.subr.mxu0 0.0
    %88 = vmatpush2.msra.mxu0 0.0
    %89 = vmatprep.subr.mxu0 0.0
    %90 = vmatpush2.msra.mxu0 0.0
    %91 = vmatprep.subr.mxu0 0.0
    %92 = vmatpush2.msra.mxu0 0.0
    %93 = vmatprep.subr.mxu0 0.0
    %94 = vmatpush2.msra.mxu0 0.0
    %95 = vmatprep.subr.mxu0 0.0
    %96 = vmatpush2.msra.mxu0 0.0
    %97 = vmatprep.subr.mxu0 0.0
    %98 = vmatpush2.msra.mxu0 0.0
    %99 = vmatprep.subr.mxu0 0.0
    %100 = vmatpush2.msra.mxu0 0.0
    %101 = vmatprep.subr.mxu0 0.0
    %102 = vmatpush2.msra.mxu0 0.0
    %103 = vmatprep.subr.mxu0 0.0
    %104 = vmatpush2.msra.mxu0 0.0
    %105 = vmatprep.subr.mxu0 0.0
    %106 = vmatpush2.msra.mxu0 0.0
    %107 = vmatprep.subr.mxu0 0.0
    %108 = vmatpush2.msra.mxu0 0.0
    %109 = vmatprep.subr.mxu0 0.0
    %110 = vmatpush2.msra.mxu0 0.0
    %111 = vmatprep.subr.mxu0 0.0
    %112 = vmatpush2.msra.mxu0 0.0
    %113 = vmatprep.subr.mxu0 0.0
    %114 = vmatpush2.msra.mxu0 0.0
    %115 = vmatprep.mubr.f32.mxu0 0.0
    %116 = vmatmul.mubr.f32.gmra.mxu0 %v46
    %v117 = vpop.f32.mrf.mxu0
    %v118 = vadd.f32 0.0, %v117
    %v119 = vpop.f32.mrf.mxu0
    %120 = vmatprep.mubr.f32.mxu0 0.0
    %121 = vmatmul.mubr.f32.gmra.mxu0 %v49
    %v122 = vpop.f32.mrf.mxu0
    %v123 = vadd.f32 0.0, %v122
    %v124 = vpop.f32.mrf.mxu0
    %125 = vdwg.mxu0
    %vm126 = vcmask 64512
    %v128 = vsel %vm126, %v35, 0
    %v131 = vsel %vm126, %v36, 0
    %133 = vmatprep.subr.mxu0 0.0
    %134 = vmatpush1.msra.mxu0 0.0
    %135 = vmatprep.subr.mxu0 0.0
    %136 = vmatpush1.msra.mxu0 0.0
    %137 = vmatprep.subr.mxu0 0.0
    %138 = vmatpush1.msra.mxu0 0.0
    %139 = vmatprep.subr.mxu0 0.0
    %140 = vmatpush1.msra.mxu0 0.0
    %141 = vmatprep.subr.mxu0 0.0
    %142 = vmatpush1.msra.mxu0 0.0
    %143 = vmatprep.subr.mxu0 0.0
    %144 = vmatpush1.msra.mxu0 0.0
    %145 = vmatprep.subr.mxu0 0.0
    %146 = vmatpush1.msra.mxu0 0.0
    %147 = vmatprep.subr.mxu0 0.0
    %148 = vmatpush1.msra.mxu0 0.0
    %149 = vmatprep.subr.mxu0 0.0
    %150 = vmatpush1.msra.mxu0 0.0
    %151 = vmatprep.subr.mxu0 0.0
    %152 = vmatpush1.msra.mxu0 0.0
    %153 = vmatprep.subr.mxu0 0.0
    %154 = vmatpush1.msra.mxu0 0.0
    %155 = vmatprep.subr.mxu0 0.0
    %156 = vmatpush1.msra.mxu0 0.0
    %157 = vmatprep.subr.mxu0 0.0
    %158 = vmatpush1.msra.mxu0 0.0
    %159 = vmatprep.subr.mxu0 0.0
    %160 = vmatpush1.msra.mxu0 0.0
    %161 = vmatprep.subr.mxu0 0.0
    %162 = vmatpush1.msra.mxu0 0.0
    %163 = vmatprep.subr.mxu0 0.0
    %164 = vmatpush1.msra.mxu0 %v39
    %165 = vmatprep.subr.mxu0 0.0
    %166 = vmatpush2.msra.mxu0 0.0
    %167 = vmatprep.subr.mxu0 0.0
    %168 = vmatpush2.msra.mxu0 0.0
    %169 = vmatprep.subr.mxu0 0.0
    %170 = vmatpush2.msra.mxu0 0.0
    %171 = vmatprep.subr.mxu0 0.0
    %172 = vmatpush2.msra.mxu0 0.0
    %173 = vmatprep.subr.mxu0 0.0
    %174 = vmatpush2.msra.mxu0 0.0
    %175 = vmatprep.subr.mxu0 0.0
    %176 = vmatpush2.msra.mxu0 0.0
    %177 = vmatprep.subr.mxu0 0.0
    %178 = vmatpush2.msra.mxu0 0.0
    %179 = vmatprep.subr.mxu0 0.0
    %180 = vmatpush2.msra.mxu0 0.0
    %181 = vmatprep.subr.mxu0 0.0
    %182 = vmatpush2.msra.mxu0 0.0
    %183 = vmatprep.subr.mxu0 0.0
    %184 = vmatpush2.msra.mxu0 0.0
    %185 = vmatprep.subr.mxu0 0.0
    %186 = vmatpush2.msra.mxu0 0.0
    %187 = vmatprep.subr.mxu0 0.0
    %188 = vmatpush2.msra.mxu0 0.0
    %189 = vmatprep.subr.mxu0 0.0
    %190 = vmatpush2.msra.mxu0 0.0
    %191 = vmatprep.subr.mxu0 0.0
    %192 = vmatpush2.msra.mxu0 0.0
    %193 = vmatprep.subr.mxu0 0.0
    %194 = vmatpush2.msra.mxu0 0.0
    %195 = vmatprep.subr.mxu0 0.0
    %196 = vmatpush2.msra.mxu0 0.0
    %197 = vmatprep.mubr.f32.mxu0 0.0
    %198 = vmatmul.mubr.f32.gmra.mxu0 %v128
    %v199 = vpop.f32.mrf.mxu0
    %v200 = vadd.f32 %v118, %v199
    %v201 = vpop.f32.mrf.mxu0
    %202 = vmatprep.mubr.f32.mxu0 0.0
    %203 = vmatmul.mubr.f32.gmra.mxu0 %v131
    %v204 = vpop.f32.mrf.mxu0
    %v205 = vadd.f32 %v123, %v204
    %v206 = vpop.f32.mrf.mxu0
    %207 = vdwg.mxu0
    %v208 = vld [vmem:[%s4] sm:$0x1]
    %v210 = vlaneseq
    %v211 = vshrl.u32 %v210, 7
    %v212 = vsub.s32 0, %v211
    %v213 = vrot.slane %v208, %v212
    %v215 = vadd.f32 %v200, %v213
    %v216 = vadd.f32 %v205, %v213
    %v217 = vxor.u32 %v215, 2147483648
    %v218 = vxor.u32 %v216, 2147483648
    %v219 = vmul.f32 %v217, 1.442695
    %v220 = vpow.pop %v219
    %v221 = vmul.f32 %v218, 1.442695
    %v222 = vpow.pop %v221
    %v223 = vadd.f32 %v220, 1.0
    %v224 = vadd.f32 %v222, 1.0
    %v225 = vrcp.pop %v223
    %v226 = vmul.f32 1.0, %v225
    %v227 = vrcp.pop %v224
    %v228 = vmul.f32 1.0, %v227
    %v229 = vmul.f32 %v226, %v37
    %v230 = vmul.f32 %v228, %v38
    %231 = vst.msk [vmem:[#allocation5] sm:$0xff] %vm44, %v229
    %232 = vst.msk [vmem:[#allocation5 + $0x8] sm:$0xff] %vm44, %v230
    // Predicated region
    $region26: #{gated_message.1} parent=1 // pred_check
      _
    $region27: #{gated_message.1} parent=1 // pred_check_branch
      %234 = sbr.rel (0) target = $region29
    $region28: #{gated_message.1} parent=1 // pred_region
      %s236 = ssub.s32 256, 256
      %237 = vsyncadd [#allocation4], %s236
      %s238 = sshll.u32 [#allocation5], 4
      %s239 = int_to_ptr.vmem [resolvable:$true] %s238
      %244 = dma.vmem_to_hbm [thread:$0]  %s239, 256, %s5, [#allocation4], 128, 128, 8
    $region29: #{gated_message.1} parent=1 // pred_fallthru
      _
    // Predicated region
    $region30: #{gated_message.1} parent=1 // pred_check
      _
    $region31: #{gated_message.1} parent=1 // pred_check_branch
      %246 = sbr.rel (0) target = $region33
    $region32: #{gated_message.1} parent=1 // pred_region
      %247 = dma.done [#allocation4], 256
    $region33: #{gated_message.1} parent=1 // pred_fallthru
      _
    %248 = vsyncpa [#allocation3], 1
    %249 = vsyncpa [#allocation4], 1

</llo_original>
